<compile_context>
chip_gen: v6e
topology: v6e:2x2x1
jax: 0.10.0
libtpu: 0.0.40
codegen_flags: <defaults>
</compile_context>

<pallas_src>
import functools
import math

import jax
import jax.numpy as jnp
from jax.experimental import pallas as pl
from jax.experimental.pallas import tpu as pltpu  # noqa: F401  (TPU backend assumed)


# ----------------------------------------------------------------------------
# Fused Pallas kernel: linear_1 -> (+time concat) -> linear_2 -> SiLU -> linear_3
# ----------------------------------------------------------------------------
def _action_encoder_kernel(*refs, time_cond):
    if time_cond:
        (act_ref, temb_ref, w1_ref, b1_ref, w2t_ref, w2e_ref, b2_ref,
         w3_ref, b3_ref, o_ref) = refs
    else:
        (act_ref, w1_ref, b1_ref, w2e_ref, b2_ref, w3_ref, b3_ref, o_ref) = refs

    # linear_1
    emb = jnp.dot(act_ref[...], w1_ref[...],
                  preferred_element_type=jnp.float32) + b1_ref[...]

    # linear_2 ; the torch.cat([time_emb_full, emb], -1) @ W2 is expressed as a
    # split-weight sum so the concatenated tensor never exists.
    h = jnp.dot(emb, w2e_ref[...], preferred_element_type=jnp.float32) + b2_ref[...]
    if time_cond:
        h = h + jnp.dot(temb_ref[...], w2t_ref[...],
                        preferred_element_type=jnp.float32)

    # SiLU (kept in float32; exp runs on the EUP slot)
    h = h * (1.0 / (1.0 + jnp.exp(-h)))

    # linear_3
    out = jnp.dot(h, w3_ref[...], preferred_element_type=jnp.float32) + b3_ref[...]
    o_ref[...] = out.astype(o_ref.dtype)


def action_encoder_forward(params, action, time_emb=None, *, time_cond=False):
    """action: (B, T, A); time_emb: (B, W) if time_cond. Returns (B, T, W)."""
    B, T, A = action.shape
    W = params["w1"].shape[1]
    act2 = action.reshape(B * T, A)

    kernel = functools.partial(_action_encoder_kernel, time_cond=time_cond)
    out_shape = jax.ShapeDtypeStruct((B * T, W), action.dtype)

    if time_cond:
        # broadcast time embedding over the horizon (tiny, done once in XLA)
        temb_full = jnp.broadcast_to(time_emb[:, None, :], (B, T, W)).reshape(B * T, W)
        w2t = params["w2"][:W]   # rows that multiply the time embedding
        w2e = params["w2"][W:]   # rows that multiply the action embedding
        out = pl.pallas_call(kernel, out_shape=out_shape)(
            act2, temb_full,
            params["w1"], params["b1"],
            w2t, w2e, params["b2"],
            params["w3"], params["b3"])
    else:
        out = pl.pallas_call(kernel, out_shape=out_shape)(
            act2,
            params["w1"], params["b1"],
            params["w2"], params["b2"],
            params["w3"], params["b3"])

    return out.reshape(B, T, W)


# ----------------------------------------------------------------------------
# Deterministic parameter init (weights stored as (in, out); biases as (1, out))
# ----------------------------------------------------------------------------
def init_params(key, action_dim, width, time_cond):
    k1, k2, k3 = jax.random.split(key, 3)
    in2 = 2 * width if time_cond else width
    return {
        "w1": jax.random.normal(k1, (action_dim, width), jnp.float32) / math.sqrt(action_dim),
        "b1": jnp.full((1, width), 0.01, jnp.float32),
        "w2": jax.random.normal(k2, (in2, width), jnp.float32) / math.sqrt(in2),
        "b2": jnp.full((1, width), -0.02, jnp.float32),
        "w3": jax.random.normal(k3, (width, width), jnp.float32) / math.sqrt(width),
        "b3": jnp.full((1, width), 0.03, jnp.float32),
    }


# ----------------------------------------------------------------------------
# Pure-JAX reference (mirrors the PyTorch forward, including the concat)
# ----------------------------------------------------------------------------
def reference_forward(params, action, time_emb=None, *, time_cond=False):
    B, T, _ = action.shape
    emb = action @ params["w1"] + params["b1"][0]
    if time_cond:
        temb_full = jnp.broadcast_to(time_emb[:, None, :], (B, T, time_emb.shape[-1]))
        emb = jnp.concatenate([temb_full, emb], axis=-1)
    h = emb @ params["w2"] + params["b2"][0]
    h = h * (1.0 / (1.0 + jnp.exp(-h)))          # SiLU, same formula as kernel
    return h @ params["w3"] + params["b3"][0]


# ----------------------------------------------------------------------------
if __name__ == "__main__":
    key = jax.random.PRNGKey(0)
    kp_t, kp_n, ka, kt = jax.random.split(key, 4)

    bsz, horizon, action_dim, width = 2, 8, 8, 32

    action = jax.random.normal(ka, (bsz, horizon, action_dim), jnp.float32)
    time_emb = jax.random.normal(kt, (bsz, width), jnp.float32)

    # --- time_cond = True ----------------------------------------------------
    params_t = init_params(kp_t, action_dim, width, time_cond=True)
    out_t = action_encoder_forward(params_t, action, time_emb, time_cond=True)
    out_t = jax.block_until_ready(out_t)
    ref_t = reference_forward(params_t, action, time_emb, time_cond=True)
    assert out_t.shape == (bsz, horizon, width)
    assert jnp.allclose(out_t, ref_t, atol=1e-4, rtol=1e-4)

    # --- time_cond = False ---------------------------------------------------
    params_n = init_params(kp_n, action_dim, width, time_cond=False)
    out_n = action_encoder_forward(params_n, action, time_cond=False)
    out_n = jax.block_until_ready(out_n)
    ref_n = reference_forward(params_n, action, time_cond=False)
    assert out_n.shape == (bsz, horizon, width)
    assert jnp.allclose(out_n, ref_n, atol=1e-4, rtol=1e-4)

    print("KERNEL_OK")
</pallas_src>

<mosaic_0001>
module attributes {stable_mosaic.version = 11 : i64} {
  func.func @_action_encoder_kernel(%arg0: memref<16x8xf32, #tpu.memory_space<vmem>>, %arg1: memref<16x32xf32, #tpu.memory_space<vmem>>, %arg2: memref<8x32xf32, #tpu.memory_space<vmem>>, %arg3: memref<1x32xf32, #tpu.memory_space<vmem>>, %arg4: memref<32x32xf32, #tpu.memory_space<vmem>>, %arg5: memref<32x32xf32, #tpu.memory_space<vmem>>, %arg6: memref<1x32xf32, #tpu.memory_space<vmem>>, %arg7: memref<32x32xf32, #tpu.memory_space<vmem>>, %arg8: memref<1x32xf32, #tpu.memory_space<vmem>>, %arg9: memref<16x32xf32, #tpu.memory_space<vmem>>) attributes {dimension_semantics = [], scalar_prefetch = 0 : i64, scratch_operands = 0 : i64, tpu.core_type = #tpu.core_type<tc>} {
    %c0 = arith.constant 0 : index
    %c0_0 = arith.constant 0 : index
    %0 = vector.load %arg0[%c0, %c0_0] : memref<16x8xf32, #tpu.memory_space<vmem>>, vector<16x8xf32>
    %c0_1 = arith.constant 0 : index
    %c0_2 = arith.constant 0 : index
    %1 = vector.load %arg2[%c0_1, %c0_2] : memref<8x32xf32, #tpu.memory_space<vmem>>, vector<8x32xf32>
    %cst = arith.constant dense<0.000000e+00> : vector<16x32xf32>
    %2 = tpu.matmul %0, %1, %cst {dimension_numbers = #tpu.dot_dimension_numbers<[1], [0], [0], [1], [0, 0, 1, 1], [], []>} : vector<16x8xf32>, vector<8x32xf32>, vector<16x32xf32> -> vector<16x32xf32>
    %c0_3 = arith.constant 0 : index
    %c0_4 = arith.constant 0 : index
    %3 = vector.load %arg3[%c0_3, %c0_4] : memref<1x32xf32, #tpu.memory_space<vmem>>, vector<1x32xf32>
    %4 = vector.broadcast %3 : vector<1x32xf32> to vector<16x32xf32>
    %5 = arith.addf %2, %4 : vector<16x32xf32>
    %c0_5 = arith.constant 0 : index
    %c0_6 = arith.constant 0 : index
    %6 = vector.load %arg5[%c0_5, %c0_6] : memref<32x32xf32, #tpu.memory_space<vmem>>, vector<32x32xf32>
    %cst_7 = arith.constant dense<0.000000e+00> : vector<16x32xf32>
    %7 = tpu.matmul %5, %6, %cst_7 {dimension_numbers = #tpu.dot_dimension_numbers<[1], [0], [0], [1], [0, 0, 1, 1], [], []>} : vector<16x32xf32>, vector<32x32xf32>, vector<16x32xf32> -> vector<16x32xf32>
    %c0_8 = arith.constant 0 : index
    %c0_9 = arith.constant 0 : index
    %8 = vector.load %arg6[%c0_8, %c0_9] : memref<1x32xf32, #tpu.memory_space<vmem>>, vector<1x32xf32>
    %9 = vector.broadcast %8 : vector<1x32xf32> to vector<16x32xf32>
    %10 = arith.addf %7, %9 : vector<16x32xf32>
    %c0_10 = arith.constant 0 : index
    %c0_11 = arith.constant 0 : index
    %11 = vector.load %arg1[%c0_10, %c0_11] : memref<16x32xf32, #tpu.memory_space<vmem>>, vector<16x32xf32>
    %c0_12 = arith.constant 0 : index
    %c0_13 = arith.constant 0 : index
    %12 = vector.load %arg4[%c0_12, %c0_13] : memref<32x32xf32, #tpu.memory_space<vmem>>, vector<32x32xf32>
    %cst_14 = arith.constant dense<0.000000e+00> : vector<16x32xf32>
    %13 = tpu.matmul %11, %12, %cst_14 {dimension_numbers = #tpu.dot_dimension_numbers<[1], [0], [0], [1], [0, 0, 1, 1], [], []>} : vector<16x32xf32>, vector<32x32xf32>, vector<16x32xf32> -> vector<16x32xf32>
    %14 = arith.addf %10, %13 : vector<16x32xf32>
    %cst_15 = arith.constant 0.000000e+00 : f32
    %15 = vector.broadcast %cst_15 : f32 to vector<16x32xf32>
    %16 = arith.subf %15, %14 : vector<16x32xf32>
    %17 = math.exp %16 : vector<16x32xf32>
    %cst_16 = arith.constant 1.000000e+00 : f32
    %18 = vector.broadcast %cst_16 : f32 to vector<16x32xf32>
    %19 = arith.addf %18, %17 : vector<16x32xf32>
    %cst_17 = arith.constant 1.000000e+00 : f32
    %20 = vector.broadcast %cst_17 : f32 to vector<16x32xf32>
    %21 = arith.divf %20, %19 : vector<16x32xf32>
    %22 = arith.mulf %14, %21 : vector<16x32xf32>
    %c0_18 = arith.constant 0 : index
    %c0_19 = arith.constant 0 : index
    %23 = vector.load %arg7[%c0_18, %c0_19] : memref<32x32xf32, #tpu.memory_space<vmem>>, vector<32x32xf32>
    %cst_20 = arith.constant dense<0.000000e+00> : vector<16x32xf32>
    %24 = tpu.matmul %22, %23, %cst_20 {dimension_numbers = #tpu.dot_dimension_numbers<[1], [0], [0], [1], [0, 0, 1, 1], [], []>} : vector<16x32xf32>, vector<32x32xf32>, vector<16x32xf32> -> vector<16x32xf32>
    %c0_21 = arith.constant 0 : index
    %c0_22 = arith.constant 0 : index
    %25 = vector.load %arg8[%c0_21, %c0_22] : memref<1x32xf32, #tpu.memory_space<vmem>>, vector<1x32xf32>
    %26 = vector.broadcast %25 : vector<1x32xf32> to vector<16x32xf32>
    %27 = arith.addf %24, %26 : vector<16x32xf32>
    %c0_23 = arith.constant 0 : index
    %c0_24 = arith.constant 0 : index
    %28 = vector.load %arg9[%c0_23, %c0_24] : memref<16x32xf32, #tpu.memory_space<vmem>>, vector<16x32xf32>
    tpu.vector_store %arg9[%c0_23, %c0_24], %27 {strides = array<i32>} : memref<16x32xf32, #tpu.memory_space<vmem>>, vector<16x32xf32>,
    return
  }
}

</mosaic_0001>

<llo_original>
// kernel: tpu_custom_call.1
$region0: #{tpu_custom_call.1}
  #allocation0 [shape = 'u32[]', space=smem, size = 0x4, offset = 0x4, fixed_abs, tag = 'smem constant byte address 0x4 - core index']
  #allocation1 [shape = 'u32[144,128]{1,0:T(1,128)}', space=vmem, size = 0x12000, scoped, tag = 'internal scratch']
  %s0 = inlined_call_operand.vmem [shape: f32[16,8], index: 0, kind: input, shape index: {}]
  %s1 = inlined_call_operand.hbm [shape: f32[16,32], index: 1, kind: input, shape index: {}]
  %s2 = inlined_call_operand.hbm [shape: f32[8,32], index: 2, kind: input, shape index: {}]
  %s3 = inlined_call_operand.vmem [shape: f32[1,32], index: 3, kind: input, shape index: {}]
  %s4 = inlined_call_operand.hbm [shape: f32[32,32], index: 4, kind: input, shape index: {}]
  %s5 = inlined_call_operand.vmem [shape: f32[32,32], index: 5, kind: input, shape index: {}]
  %s6 = inlined_call_operand.vmem [shape: f32[1,32], index: 6, kind: input, shape index: {}]
  %s7 = inlined_call_operand.hbm [shape: f32[32,32], index: 7, kind: input, shape index: {}]
  %s8 = inlined_call_operand.vmem [shape: f32[1,32], index: 8, kind: input, shape index: {}]
  %s9 = inlined_call_operand.hbm [shape: f32[16,32], index: 9, kind: output, shape index: {}]
  %s10 = sld [smem:[#allocation0]]
  $region62: #{tpu_custom_call.1} parent=0
    _
  %s12 = ssub.s32 1, %s10
  %s13 = scalar_select 0, %s12, %s10
  $region1: #{tpu_custom_call.1} parent=0
    #allocation2 [shape = 'u8[8192]{0}', space=vmem, size = 0x2000, scoped, tag = 'input window, operand 1, single buffered']
    #allocation3 [shape = 's32[1]{0}', space=sflag, size = 0x4, scoped, tag = 'scoped memory for tpu_custom_call.1']
    #allocation4 [shape = 's32[1]{0}', space=sflag, size = 0x4, scoped, tag = 'scoped memory for tpu_custom_call.1']
    #allocation5 [shape = 'u8[4096]{0}', space=vmem, size = 0x1000, scoped, tag = 'input window, operand 2, single buffered']
    #allocation6 [shape = 's32[1]{0}', space=sflag, size = 0x4, scoped, tag = 'scoped memory for tpu_custom_call.1']
    #allocation7 [shape = 'u8[16384]{0}', space=vmem, size = 0x4000, scoped, tag = 'input window, operand 4, single buffered']
    #allocation8 [shape = 'u8[16384]{0}', space=vmem, size = 0x4000, scoped, tag = 'input window, operand 7, single buffered']
    #allocation9 [shape = 's32[1]{0}', space=sflag, size = 0x4, scoped, tag = 'scoped memory for tpu_custom_call.1']
    #allocation10 [shape = 'u8[8192]{0}', space=vmem, size = 0x2000, scoped, tag = 'output window, operand 0, single buffered']
    %14 = vsyncpa [#allocation3], 0
    %15 = vsyncpa [#allocation6], 0
    %16 = vsyncpa [#allocation9], 0
    %17 = vsyncpa [#allocation4], 0
    // Predicated region
    $region2: #{tpu_custom_call.1} parent=1 // pred_check
      _
    $region3: #{tpu_custom_call.1} parent=1 // pred_check_branch
      %19 = sbr.rel (0) target = $region5
    $region4: #{tpu_custom_call.1} parent=1 // pred_region
      _
    $region5: #{tpu_custom_call.1} parent=1 // pred_fallthru
      _
    // Predicated region
    $region6: #{tpu_custom_call.1} parent=1 // pred_check
      _
    $region7: #{tpu_custom_call.1} parent=1 // pred_check_branch
      %21 = sbr.rel (0) target = $region9
    $region8: #{tpu_custom_call.1} parent=1 // pred_region
      %s23 = ssub.s32 256, 256
      %24 = vsyncadd [#allocation3], %s23
      %s25 = sshll.u32 [#allocation2], 4
      %s26 = int_to_ptr.vmem [resolvable:$true] %s25
      %31 = dma.hbm_to_vmem [thread:$0]  %s1, 256, %s26, [#allocation3], 128, 128, 8
    $region9: #{tpu_custom_call.1} parent=1 // pred_fallthru
      _
    // Predicated region
    $region10: #{tpu_custom_call.1} parent=1 // pred_check
      _
    $region11: #{tpu_custom_call.1} parent=1 // pred_check_branch
      %33 = sbr.rel (0) target = $region13
    $region12: #{tpu_custom_call.1} parent=1 // pred_region
      %s35 = ssub.s32 128, 128
      %36 = vsyncadd [#allocation6], %s35
      %s38 = sshll.u32 [#allocation5], 4
      %s39 = int_to_ptr.vmem [resolvable:$true] %s38
      %41 = dma.hbm_to_vmem [thread:$0]  %s2, 128, %s39, [#allocation6]
    $region13: #{tpu_custom_call.1} parent=1 // pred_fallthru
      _
    // Predicated region
    $region14: #{tpu_custom_call.1} parent=1 // pred_check
      _
    $region15: #{tpu_custom_call.1} parent=1 // pred_check_branch
      %43 = sbr.rel (0) target = $region17
    $region16: #{tpu_custom_call.1} parent=1 // pred_region
      _
    $region17: #{tpu_custom_call.1} parent=1 // pred_fallthru
      _
    // Predicated region
    $region18: #{tpu_custom_call.1} parent=1 // pred_check
      _
    $region19: #{tpu_custom_call.1} parent=1 // pred_check_branch
      %45 = sbr.rel (0) target = $region21
    $region20: #{tpu_custom_call.1} parent=1 // pred_region
      %s47 = ssub.s32 512, 512
      %48 = vsyncadd [#allocation6], %s47
      %s49 = sshll.u32 [#allocation7], 4
      %s50 = int_to_ptr.vmem [resolvable:$true] %s49
      %55 = dma.hbm_to_vmem [thread:$0]  %s4, 512, %s50, [#allocation6], 128, 128, 8
    $region21: #{tpu_custom_call.1} parent=1 // pred_fallthru
      _
    // Predicated region
    $region22: #{tpu_custom_call.1} parent=1 // pred_check
      _
    $region23: #{tpu_custom_call.1} parent=1 // pred_check_branch
      %57 = sbr.rel (0) target = $region25
    $region24: #{tpu_custom_call.1} parent=1 // pred_region
      _
    $region25: #{tpu_custom_call.1} parent=1 // pred_fallthru
      _
    // Predicated region
    $region26: #{tpu_custom_call.1} parent=1 // pred_check
      _
    $region27: #{tpu_custom_call.1} parent=1 // pred_check_branch
      %59 = sbr.rel (0) target = $region29
    $region28: #{tpu_custom_call.1} parent=1 // pred_region
      _
    $region29: #{tpu_custom_call.1} parent=1 // pred_fallthru
      _
    // Predicated region
    $region30: #{tpu_custom_call.1} parent=1 // pred_check
      _
    $region31: #{tpu_custom_call.1} parent=1 // pred_check_branch
      %61 = sbr.rel (0) target = $region33
    $region32: #{tpu_custom_call.1} parent=1 // pred_region
      %s63 = ssub.s32 512, 512
      %64 = vsyncadd [#allocation9], %s63
      %s65 = sshll.u32 [#allocation8], 4
      %s66 = int_to_ptr.vmem [resolvable:$true] %s65
      %71 = dma.hbm_to_vmem [thread:$0]  %s7, 512, %s66, [#allocation9], 128, 128, 8
    $region33: #{tpu_custom_call.1} parent=1 // pred_fallthru
      _
    // Predicated region
    $region34: #{tpu_custom_call.1} parent=1 // pred_check
      _
    $region35: #{tpu_custom_call.1} parent=1 // pred_check_branch
      %73 = sbr.rel (0) target = $region37
    $region36: #{tpu_custom_call.1} parent=1 // pred_region
      _
    $region37: #{tpu_custom_call.1} parent=1 // pred_fallthru
      _
    // Predicated region
    $region38: #{tpu_custom_call.1} parent=1 // pred_check
      _
    $region39: #{tpu_custom_call.1} parent=1 // pred_check_branch
      %75 = sbr.rel (0) target = $region41
    $region40: #{tpu_custom_call.1} parent=1 // pred_region
      %76 = dma.done [#allocation3], 256
    $region41: #{tpu_custom_call.1} parent=1 // pred_fallthru
      _
    // Predicated region
    $region42: #{tpu_custom_call.1} parent=1 // pred_check
      _
    $region43: #{tpu_custom_call.1} parent=1 // pred_check_branch
      %78 = sbr.rel (0) target = $region45
    $region44: #{tpu_custom_call.1} parent=1 // pred_region
      %79 = dma.done [#allocation6], 128
    $region45: #{tpu_custom_call.1} parent=1 // pred_fallthru
      _
    // Predicated region
    $region46: #{tpu_custom_call.1} parent=1 // pred_check
      _
    $region47: #{tpu_custom_call.1} parent=1 // pred_check_branch
      %81 = sbr.rel (0) target = $region49
    $region48: #{tpu_custom_call.1} parent=1 // pred_region
      %82 = dma.done [#allocation6], 512
    $region49: #{tpu_custom_call.1} parent=1 // pred_fallthru
      _
    // Predicated region
    $region50: #{tpu_custom_call.1} parent=1 // pred_check
      _
    $region51: #{tpu_custom_call.1} parent=1 // pred_check_branch
      %84 = sbr.rel (0) target = $region53
    $region52: #{tpu_custom_call.1} parent=1 // pred_region
      %85 = dma.done [#allocation9], 512
    $region53: #{tpu_custom_call.1} parent=1 // pred_fallthru
      _
    %v86 = vld [vmem:[%s0] sm:$0xff]
    %v87 = vld [vmem:[%s0 + $0x8] sm:$0xff]
    %v88 = vld [vmem:[#allocation5] sm:$0xff]
    %v89 = vld [vmem:[%s3] sm:$0x1]
    %v91 = vlaneseq
    %v92 = vshrl.u32 %v91, 7
    %v93 = vsub.s32 0, %v92
    %v94 = vrot.slane %v89, %v93
    %vm96 = vcmask 64512
    %v98 = vsel %vm96, %v86, 0
    %v101 = vsel %vm96, %v87, 0
    %103 = vmatprep.subr.mxu0 0.0
    %104 = vmatpush1.msra.mxu0 0.0
    %105 = vmatprep.subr.mxu0 0.0
    %106 = vmatpush1.msra.mxu0 0.0
    %107 = vmatprep.subr.mxu0 0.0
    %108 = vmatpush1.msra.mxu0 0.0
    %109 = vmatprep.subr.mxu0 0.0
    %110 = vmatpush1.msra.mxu0 0.0
    %111 = vmatprep.subr.mxu0 0.0
    %112 = vmatpush1.msra.mxu0 0.0
    %113 = vmatprep.subr.mxu0 0.0
    %114 = vmatpush1.msra.mxu0 0.0
    %115 = vmatprep.subr.mxu0 0.0
    %116 = vmatpush1.msra.mxu0 0.0
    %117 = vmatprep.subr.mxu0 0.0
    %118 = vmatpush1.msra.mxu0 0.0
    %119 = vmatprep.subr.mxu0 0.0
    %120 = vmatpush1.msra.mxu0 0.0
    %121 = vmatprep.subr.mxu0 0.0
    %122 = vmatpush1.msra.mxu0 0.0
    %123 = vmatprep.subr.mxu0 0.0
    %124 = vmatpush1.msra.mxu0 0.0
    %125 = vmatprep.subr.mxu0 0.0
    %126 = vmatpush1.msra.mxu0 0.0
    %127 = vmatprep.subr.mxu0 0.0
    %128 = vmatpush1.msra.mxu0 0.0
    %129 = vmatprep.subr.mxu0 0.0
    %130 = vmatpush1.msra.mxu0 0.0
    %131 = vmatprep.subr.mxu0 0.0
    %132 = vmatpush1.msra.mxu0 0.0
    %133 = vmatprep.subr.mxu0 0.0
    %134 = vmatpush1.msra.mxu0 %v88
    %135 = vmatprep.subr.mxu0 0.0
    %136 = vmatpush2.msra.mxu0 0.0
    %137 = vmatprep.subr.mxu0 0.0
    %138 = vmatpush2.msra.mxu0 0.0
    %139 = vmatprep.subr.mxu0 0.0
    %140 = vmatpush2.msra.mxu0 0.0
    %141 = vmatprep.subr.mxu0 0.0
    %142 = vmatpush2.msra.mxu0 0.0
    %143 = vmatprep.subr.mxu0 0.0
    %144 = vmatpush2.msra.mxu0 0.0
    %145 = vmatprep.subr.mxu0 0.0
    %146 = vmatpush2.msra.mxu0 0.0
    %147 = vmatprep.subr.mxu0 0.0
    %148 = vmatpush2.msra.mxu0 0.0
    %149 = vmatprep.subr.mxu0 0.0
    %150 = vmatpush2.msra.mxu0 0.0
    %151 = vmatprep.subr.mxu0 0.0
    %152 = vmatpush2.msra.mxu0 0.0
    %153 = vmatprep.subr.mxu0 0.0
    %154 = vmatpush2.msra.mxu0 0.0
    %155 = vmatprep.subr.mxu0 0.0
    %156 = vmatpush2.msra.mxu0 0.0
    %157 = vmatprep.subr.mxu0 0.0
    %158 = vmatpush2.msra.mxu0 0.0
    %159 = vmatprep.subr.mxu0 0.0
    %160 = vmatpush2.msra.mxu0 0.0
    %161 = vmatprep.subr.mxu0 0.0
    %162 = vmatpush2.msra.mxu0 0.0
    %163 = vmatprep.subr.mxu0 0.0
    %164 = vmatpush2.msra.mxu0 0.0
    %165 = vmatprep.subr.mxu0 0.0
    %166 = vmatpush2.msra.mxu0 0.0
    %167 = vmatprep.mubr.f32.mxu0 0.0
    %168 = vmatmul.mubr.f32.gmra.mxu0 %v98
    %v169 = vpop.f32.mrf.mxu0
    %v170 = vadd.f32 %v94, %v169
    %v171 = vpop.f32.mrf.mxu0
    %172 = vmatprep.mubr.f32.mxu0 0.0
    %173 = vmatmul.mubr.f32.gmra.mxu0 %v101
    %v174 = vpop.f32.mrf.mxu0
    %v175 = vadd.f32 %v94, %v174
    %v176 = vpop.f32.mrf.mxu0
    %177 = vdwg.mxu0
    %v178 = vld [vmem:[%s5] sm:$0xff]
    %v179 = vld [vmem:[%s5 + $0x8] sm:$0xff]
    %v180 = vld [vmem:[%s5 + $0x10] sm:$0xff]
    %v181 = vld [vmem:[%s5 + $0x18] sm:$0xff]
    %v182 = vld [vmem:[%s6] sm:$0x1]
    %v184 = vlaneseq
    %v185 = vshrl.u32 %v184, 7
    %v186 = vsub.s32 0, %v185
    %v187 = vrot.slane %v182, %v186
    %vm189 = vcmask 261120
    %v191 = vsel %vm189, %v170, 0
    %v194 = vsel %vm189, %v175, 0
    %196 = vmatprep.subr.mxu0 0.0
    %197 = vmatpush1.msra.mxu0 0.0
    %198 = vmatprep.subr.mxu0 0.0
    %199 = vmatpush1.msra.mxu0 0.0
    %200 = vmatprep.subr.mxu0 0.0
    %201 = vmatpush1.msra.mxu0 0.0
    %202 = vmatprep.subr.mxu0 0.0
    %203 = vmatpush1.msra.mxu0 0.0
    %204 = vmatprep.subr.mxu0 0.0
    %205 = vmatpush1.msra.mxu0 0.0
    %206 = vmatprep.subr.mxu0 0.0
    %207 = vmatpush1.msra.mxu0 0.0
    %208 = vmatprep.subr.mxu0 0.0
    %209 = vmatpush1.msra.mxu0 0.0
    %210 = vmatprep.subr.mxu0 0.0
    %211 = vmatpush1.msra.mxu0 0.0
    %212 = vmatprep.subr.mxu0 0.0
    %213 = vmatpush1.msra.mxu0 0.0
    %214 = vmatprep.subr.mxu0 0.0
    %215 = vmatpush1.msra.mxu0 0.0
    %216 = vmatprep.subr.mxu0 0.0
    %217 = vmatpush1.msra.mxu0 0.0
    %218 = vmatprep.subr.mxu0 0.0
    %219 = vmatpush1.msra.mxu0 0.0
    %220 = vmatprep.subr.mxu0 0.0
    %221 = vmatpush1.msra.mxu0 %v181
    %222 = vmatprep.subr.mxu0 0.0
    %223 = vmatpush1.msra.mxu0 %v180
    %224 = vmatprep.subr.mxu0 0.0
    %225 = vmatpush1.msra.mxu0 %v179
    %226 = vmatprep.subr.mxu0 0.0
    %227 = vmatpush1.msra.mxu0 %v178
    %228 = vmatprep.subr.mxu0 0.0
    %229 = vmatpush2.msra.mxu0 0.0
    %230 = vmatprep.subr.mxu0 0.0
    %231 = vmatpush2.msra.mxu0 0.0
    %232 = vmatprep.subr.mxu0 0.0
    %233 = vmatpush2.msra.mxu0 0.0
    %234 = vmatprep.subr.mxu0 0.0
    %235 = vmatpush2.msra.mxu0 0.0
    %236 = vmatprep.subr.mxu0 0.0
    %237 = vmatpush2.msra.mxu0 0.0
    %238 = vmatprep.subr.mxu0 0.0
    %239 = vmatpush2.msra.mxu0 0.0
    %240 = vmatprep.subr.mxu0 0.0
    %241 = vmatpush2.msra.mxu0 0.0
    %242 = vmatprep.subr.mxu0 0.0
    %243 = vmatpush2.msra.mxu0 0.0
    %244 = vmatprep.subr.mxu0 0.0
    %245 = vmatpush2.msra.mxu0 0.0
    %246 = vmatprep.subr.mxu0 0.0
    %247 = vmatpush2.msra.mxu0 0.0
    %248 = vmatprep.subr.mxu0 0.0
    %249 = vmatpush2.msra.mxu0 0.0
    %250 = vmatprep.subr.mxu0 0.0
    %251 = vmatpush2.msra.mxu0 0.0
    %252 = vmatprep.subr.mxu0 0.0
    %253 = vmatpush2.msra.mxu0 0.0
    %254 = vmatprep.subr.mxu0 0.0
    %255 = vmatpush2.msra.mxu0 0.0
    %256 = vmatprep.subr.mxu0 0.0
    %257 = vmatpush2.msra.mxu0 0.0
    %258 = vmatprep.subr.mxu0 0.0
    %259 = vmatpush2.msra.mxu0 0.0
    %260 = vmatprep.mubr.f32.mxu0 0.0
    %261 = vmatmul.mubr.f32.gmra.mxu0 %v191
    %v262 = vpop.f32.mrf.mxu0
    %v263 = vadd.f32 %v187, %v262
    %v264 = vpop.f32.mrf.mxu0
    %265 = vmatprep.mubr.f32.mxu0 0.0
    %266 = vmatmul.mubr.f32.gmra.mxu0 %v194
    %v267 = vpop.f32.mrf.mxu0
    %v268 = vadd.f32 %v187, %v267
    %v269 = vpop.f32.mrf.mxu0
    %270 = vdwg.mxu0
    %v271 = vld [vmem:[#allocation2] sm:$0xff]
    %v272 = vld [vmem:[#allocation2 + $0x8] sm:$0xff]
    %v273 = vld [vmem:[#allocation7] sm:$0xff]
    %v274 = vld [vmem:[#allocation7 + $0x8] sm:$0xff]
    %v275 = vld [vmem:[#allocation7 + $0x10] sm:$0xff]
    %v276 = vld [vmem:[#allocation7 + $0x18] sm:$0xff]
    %v278 = vsel %vm189, %v271, 0
    %v281 = vsel %vm189, %v272, 0
    %283 = vmatprep.subr.mxu0 0.0
    %284 = vmatpush1.msra.mxu0 0.0
    %285 = vmatprep.subr.mxu0 0.0
    %286 = vmatpush1.msra.mxu0 0.0
    %287 = vmatprep.subr.mxu0 0.0
    %288 = vmatpush1.msra.mxu0 0.0
    %289 = vmatprep.subr.mxu0 0.0
    %290 = vmatpush1.msra.mxu0 0.0
    %291 = vmatprep.subr.mxu0 0.0
    %292 = vmatpush1.msra.mxu0 0.0
    %293 = vmatprep.subr.mxu0 0.0
    %294 = vmatpush1.msra.mxu0 0.0
    %295 = vmatprep.subr.mxu0 0.0
    %296 = vmatpush1.msra.mxu0 0.0
    %297 = vmatprep.subr.mxu0 0.0
    %298 = vmatpush1.msra.mxu0 0.0
    %299 = vmatprep.subr.mxu0 0.0
    %300 = vmatpush1.msra.mxu0 0.0
    %301 = vmatprep.subr.mxu0 0.0
    %302 = vmatpush1.msra.mxu0 0.0
    %303 = vmatprep.subr.mxu0 0.0
    %304 = vmatpush1.msra.mxu0 0.0
    %305 = vmatprep.subr.mxu0 0.0
    %306 = vmatpush1.msra.mxu0 0.0
    %307 = vmatprep.subr.mxu0 0.0
    %308 = vmatpush1.msra.mxu0 %v276
    %309 = vmatprep.subr.mxu0 0.0
    %310 = vmatpush1.msra.mxu0 %v275
    %311 = vmatprep.subr.mxu0 0.0
    %312 = vmatpush1.msra.mxu0 %v274
    %313 = vmatprep.subr.mxu0 0.0
    %314 = vmatpush1.msra.mxu0 %v273
    %315 = vmatprep.subr.mxu0 0.0
    %316 = vmatpush2.msra.mxu0 0.0
    %317 = vmatprep.subr.mxu0 0.0
    %318 = vmatpush2.msra.mxu0 0.0
    %319 = vmatprep.subr.mxu0 0.0
    %320 = vmatpush2.msra.mxu0 0.0
    %321 = vmatprep.subr.mxu0 0.0
    %322 = vmatpush2.msra.mxu0 0.0
    %323 = vmatprep.subr.mxu0 0.0
    %324 = vmatpush2.msra.mxu0 0.0
    %325 = vmatprep.subr.mxu0 0.0
    %326 = vmatpush2.msra.mxu0 0.0
    %327 = vmatprep.subr.mxu0 0.0
    %328 = vmatpush2.msra.mxu0 0.0
    %329 = vmatprep.subr.mxu0 0.0
    %330 = vmatpush2.msra.mxu0 0.0
    %331 = vmatprep.subr.mxu0 0.0
    %332 = vmatpush2.msra.mxu0 0.0
    %333 = vmatprep.subr.mxu0 0.0
    %334 = vmatpush2.msra.mxu0 0.0
    %335 = vmatprep.subr.mxu0 0.0
    %336 = vmatpush2.msra.mxu0 0.0
    %337 = vmatprep.subr.mxu0 0.0
    %338 = vmatpush2.msra.mxu0 0.0
    %339 = vmatprep.subr.mxu0 0.0
    %340 = vmatpush2.msra.mxu0 0.0
    %341 = vmatprep.subr.mxu0 0.0
    %342 = vmatpush2.msra.mxu0 0.0
    %343 = vmatprep.subr.mxu0 0.0
    %344 = vmatpush2.msra.mxu0 0.0
    %345 = vmatprep.subr.mxu0 0.0
    %346 = vmatpush2.msra.mxu0 0.0
    %347 = vmatprep.mubr.f32.mxu0 0.0
    %348 = vmatmul.mubr.f32.gmra.mxu0 %v278
    %v349 = vpop.f32.mrf.mxu0
    %v350 = vadd.f32 0.0, %v349
    %v351 = vpop.f32.mrf.mxu0
    %352 = vmatprep.mubr.f32.mxu0 0.0
    %353 = vmatmul.mubr.f32.gmra.mxu0 %v281
    %v354 = vpop.f32.mrf.mxu0
    %v355 = vadd.f32 0.0, %v354
    %v356 = vpop.f32.mrf.mxu0
    %357 = vdwg.mxu0
    %v358 = vadd.f32 %v263, %v350
    %v359 = vadd.f32 %v268, %v355
    %v360 = vsub.f32 0.0, %v358
    %v361 = vsub.f32 0.0, %v359
    %v362 = vmul.f32 %v360, 1.442695
    %v363 = vpow.pop %v362
    %v364 = vmul.f32 %v361, 1.442695
    %v365 = vpow.pop %v364
    %v366 = vadd.f32 %v363, 1.0
    %v367 = vadd.f32 %v365, 1.0
    %v368 = vrcp.pop %v366
    %v369 = vmul.f32 1.0, %v368
    %v370 = vrcp.pop %v367
    %v371 = vmul.f32 1.0, %v370
    %v372 = vmul.f32 %v358, %v369
    %v373 = vmul.f32 %v359, %v371
    %v374 = vld [vmem:[#allocation8] sm:$0xff]
    %v375 = vld [vmem:[#allocation8 + $0x8] sm:$0xff]
    %v376 = vld [vmem:[#allocation8 + $0x10] sm:$0xff]
    %v377 = vld [vmem:[#allocation8 + $0x18] sm:$0xff]
    %v378 = vld [vmem:[%s8] sm:$0x1]
    %v380 = vlaneseq
    %v381 = vshrl.u32 %v380, 7
    %v382 = vsub.s32 0, %v381
    %v383 = vrot.slane %v378, %v382
    %v386 = vsel %vm189, %v372, 0
    %v389 = vsel %vm189, %v373, 0
    %391 = vmatprep.subr.mxu0 0.0
    %392 = vmatpush1.msra.mxu0 0.0
    %393 = vmatprep.subr.mxu0 0.0
    %394 = vmatpush1.msra.mxu0 0.0
    %395 = vmatprep.subr.mxu0 0.0
    %396 = vmatpush1.msra.mxu0 0.0
    %397 = vmatprep.subr.mxu0 0.0
    %398 = vmatpush1.msra.mxu0 0.0
    %399 = vmatprep.subr.mxu0 0.0
    %400 = vmatpush1.msra.mxu0 0.0
    %401 = vmatprep.subr.mxu0 0.0
    %402 = vmatpush1.msra.mxu0 0.0
    %403 = vmatprep.subr.mxu0 0.0
    %404 = vmatpush1.msra.mxu0 0.0
    %405 = vmatprep.subr.mxu0 0.0
    %406 = vmatpush1.msra.mxu0 0.0
    %407 = vmatprep.subr.mxu0 0.0
    %408 = vmatpush1.msra.mxu0 0.0
    %409 = vmatprep.subr.mxu0 0.0
    %410 = vmatpush1.msra.mxu0 0.0
    %411 = vmatprep.subr.mxu0 0.0
    %412 = vmatpush1.msra.mxu0 0.0
    %413 = vmatprep.subr.mxu0 0.0
    %414 = vmatpush1.msra.mxu0 0.0
    %415 = vmatprep.subr.mxu0 0.0
    %416 = vmatpush1.msra.mxu0 %v377
    %417 = vmatprep.subr.mxu0 0.0
    %418 = vmatpush1.msra.mxu0 %v376
    %419 = vmatprep.subr.mxu0 0.0
    %420 = vmatpush1.msra.mxu0 %v375
    %421 = vmatprep.subr.mxu0 0.0
    %422 = vmatpush1.msra.mxu0 %v374
    %423 = vmatprep.subr.mxu0 0.0
    %424 = vmatpush2.msra.mxu0 0.0
    %425 = vmatprep.subr.mxu0 0.0
    %426 = vmatpush2.msra.mxu0 0.0
    %427 = vmatprep.subr.mxu0 0.0
    %428 = vmatpush2.msra.mxu0 0.0
    %429 = vmatprep.subr.mxu0 0.0
    %430 = vmatpush2.msra.mxu0 0.0
    %431 = vmatprep.subr.mxu0 0.0
    %432 = vmatpush2.msra.mxu0 0.0
    %433 = vmatprep.subr.mxu0 0.0
    %434 = vmatpush2.msra.mxu0 0.0
    %435 = vmatprep.subr.mxu0 0.0
    %436 = vmatpush2.msra.mxu0 0.0
    %437 = vmatprep.subr.mxu0 0.0
    %438 = vmatpush2.msra.mxu0 0.0
    %439 = vmatprep.subr.mxu0 0.0
    %440 = vmatpush2.msra.mxu0 0.0
    %441 = vmatprep.subr.mxu0 0.0
    %442 = vmatpush2.msra.mxu0 0.0
    %443 = vmatprep.subr.mxu0 0.0
    %444 = vmatpush2.msra.mxu0 0.0
    %445 = vmatprep.subr.mxu0 0.0
    %446 = vmatpush2.msra.mxu0 0.0
    %447 = vmatprep.subr.mxu0 0.0
    %448 = vmatpush2.msra.mxu0 0.0
    %449 = vmatprep.subr.mxu0 0.0
    %450 = vmatpush2.msra.mxu0 0.0
    %451 = vmatprep.subr.mxu0 0.0
    %452 = vmatpush2.msra.mxu0 0.0
    %453 = vmatprep.subr.mxu0 0.0
    %454 = vmatpush2.msra.mxu0 0.0
    %455 = vmatprep.mubr.f32.mxu0 0.0
    %456 = vmatmul.mubr.f32.gmra.mxu0 %v386
    %v457 = vpop.f32.mrf.mxu0
    %v458 = vadd.f32 %v383, %v457
    %v459 = vpop.f32.mrf.mxu0
    %460 = vmatprep.mubr.f32.mxu0 0.0
    %461 = vmatmul.mubr.f32.gmra.mxu0 %v389
    %v462 = vpop.f32.mrf.mxu0
    %v463 = vadd.f32 %v383, %v462
    %v464 = vpop.f32.mrf.mxu0
    %465 = vdwg.mxu0
    %466 = vst.msk [vmem:[#allocation10] sm:$0xff] %vm189, %v458
    %467 = vst.msk [vmem:[#allocation10 + $0x8] sm:$0xff] %vm189, %v463
    // Predicated region
    $region54: #{tpu_custom_call.1} parent=1 // pred_check
      _
    $region55: #{tpu_custom_call.1} parent=1 // pred_check_branch
      %469 = sbr.rel (0) target = $region57
    $region56: #{tpu_custom_call.1} parent=1 // pred_region
      %s471 = ssub.s32 256, 256
      %472 = vsyncadd [#allocation4], %s471
      %s473 = sshll.u32 [#allocation10], 4
      %s474 = int_to_ptr.vmem [resolvable:$true] %s473
      %479 = dma.vmem_to_hbm [thread:$0]  %s474, 256, %s9, [#allocation4], 128, 128, 8
    $region57: #{tpu_custom_call.1} parent=1 // pred_fallthru
      _
    // Predicated region
    $region58: #{tpu_custom_call.1} parent=1 // pred_check
      _
    $region59: #{tpu_custom_call.1} parent=1 // pred_check_branch
      %481 = sbr.rel (0) target = $region61
    $region60: #{tpu_custom_call.1} parent=1 // pred_region
      %482 = dma.done [#allocation4], 256
    $region61: #{tpu_custom_call.1} parent=1 // pred_fallthru
      _
    %483 = vsyncpa [#allocation3], 1
    %484 = vsyncpa [#allocation6], 1
    %485 = vsyncpa [#allocation9], 1
    %486 = vsyncpa [#allocation4], 1

</llo_original>
